<compile_context>
chip_gen: v5e
topology: v5e:2x2
jax: 0.10.0
libtpu: 0.0.40
codegen_flags: <defaults>
</compile_context>

<pallas_src>
import functools

import jax
import jax.numpy as jnp
import numpy as np
from jax.experimental import pallas as pl
from jax.experimental.pallas import tpu as pltpu

EPS = 1e-5  # PyTorch BatchNorm2d default eps


def _full_spec(shape):
    # Whole-array block (block shape == array shape), trivial index map.
    return pl.BlockSpec(shape, lambda i, _n=len(shape): (0,) * _n)


def _round_up(v, m):
    return (v + m - 1) // m * m


# --------------------------- host-side weight packing -------------------------

def _toeplitz_rows(w_hwio, width, k_rows=None):
    """Fold the *horizontal* taps of a stride-1 'same' conv into banded matrices
    acting on lane-dense image rows.

    w_hwio: (KH, KW, Cin, Cout).  Returns numpy (KH, k_rows, width*Cout) with
      T[kh, win*Cin + ci, w*Cout + co] = w[kh, win - w + KW//2, ci, co]
    and zero outside the band (== implicit zero padding along W).  k_rows may be
    larger than width*Cin (zero rows) so the LHS can be padded lane-dense."""
    kh_, kw_, cin, cout = w_hwio.shape
    if k_rows is None:
        k_rows = width * cin
    pad = kw_ // 2
    w_np = np.asarray(w_hwio, np.float32)
    t = np.zeros((kh_, k_rows, width * cout), np.float32)
    for kh in range(kh_):
        for kw in range(kw_):
            for w in range(width):
                win = w + kw - pad
                if 0 <= win < width:
                    t[kh, win * cin:(win + 1) * cin,
                      w * cout:(w + 1) * cout] = w_np[kh, kw]
    return t


def pack_params(params, width):
    """One-time packing (call at init, NOT per forward):
       * fold horizontal taps into banded row-operator matrices,
       * pad the K dim to a multiple of 128 lanes and stack the 3 vertical taps,
       * cast matmul operands to bf16 (MXU),
       * tile BN affine params into the lane-dense (1, W*C) layout (f32)."""
    ni = params["w1"].shape[2]
    nh = params["w1"].shape[3]
    nf = params["w2"].shape[3]
    assert nh == nf, "expansion=1 config: conv1/conv2/idconv share the lane layout"
    k_in = _round_up(width * ni, 128)
    k_mid = _round_up(width * nh, 128)

    t1 = _toeplitz_rows(params["w1"], width, k_in)        # (3, k_in, W*nh)
    t2 = _toeplitz_rows(params["w2"], width, k_mid)       # (3, k_mid, W*nf)
    tid = _toeplitz_rows(params["wid"], width, k_in)[0]   # (k_in, W*nf)

    def lanes(v):  # (1, C) per-channel BN param -> (1, W*C), channel fastest
        return jnp.tile(jnp.asarray(v, jnp.float32), (1, width))

    return {
        "t1": jnp.asarray(t1.reshape(3 * k_in, width * nh), jnp.bfloat16),
        "t2": jnp.asarray(t2.reshape(3 * k_mid, width * nf), jnp.bfloat16),
        "tid": jnp.asarray(tid, jnp.bfloat16),
        "g1": lanes(params["g1"]), "b1": lanes(params["b1"]),
        "g2": lanes(params["g2"]), "b2": lanes(params["b2"]),
        "gid": lanes(params["gid"]), "bid": lanes(params["bid"]),
    }


# ------------------------------- Pallas kernel --------------------------------

def _resblock_kernel(x_ref, t1_ref, t2_ref, tid_ref,
                     g1_ref, b1_ref, g2_ref, b2_ref, gid_ref, bid_ref,
                     o_ref, *, img_h, cout):
    """Fused conv1+BN+ReLU -> conv2+BN -> (+ idconv+BN) -> residual add + ReLU.

    Layout: rows = (n, h) pixel-rows, lanes = (w, c) channel-fastest, i.e.
    every tensor is (N*H, W*C); outputs/intermediates are fully lane-dense."""
    f32, bf16 = jnp.float32, jnp.bfloat16
    rows, lanes = o_ref.shape            # (N*H, W*cout) = (32, 128)
    width = lanes // cout                # W
    inv_m = 1.0 / (rows * width)         # 1/(N*H*W): BN batch size per channel
    hmask = img_h - 1                    # img_h, cout, width are powers of two

    # Per-pixel-row vertical boundary masks (h == 0 / h == H-1), shape (rows,1).
    hpos = jax.lax.broadcasted_iota(jnp.int32, (rows, 1), 0) & hmask
    not_top = (hpos != 0).astype(f32)
    not_bot = (hpos != hmask).astype(f32)

    def conv3x3(v, t_ref):
        # Vertical taps via sublane rolls (XLU) + boundary masks (implements the
        # H zero padding); horizontal taps + W zero padding are pre-folded into
        # the banded t matrices.  All three taps go through ONE bf16 matmul.
        up = pltpu.roll(v, shift=1, axis=0) * not_top          # row h-1
        dn = pltpu.roll(v, shift=rows - 1, axis=0) * not_bot   # row h+1
        lhs = jnp.concatenate([up, v, dn], axis=1).astype(bf16)
        return jnp.dot(lhs, t_ref[...], preferred_element_type=f32)

    def channel_mean(v):
        # Sum over rows FIRST (XLU reduce, (rows,lanes)->(1,lanes)), then an
        # all-reduce over the W lane-groups via log2(W) cyclic lane rolls
        # (channel c lives in lanes c, c+cout, c+2*cout, ...).  Stays off the
        # MXU and in f32 for BN-stat accuracy.
        s = jnp.sum(v, axis=0, keepdims=True)
        shift = cout
        while shift < lanes:
            s = s + pltpu.roll(s, shift=shift, axis=1)
            shift *= 2
        return s * inv_m

    def batchnorm(y, g_ref, b_ref, relu):
        mean = channel_mean(y)                       # training-mode batch stats
        cent = y - mean
        var = channel_mean(cent * cent)
        out = cent * (g_ref[...] * jax.lax.rsqrt(var + EPS)) + b_ref[...]
        return jnp.maximum(out, 0.0) if relu else out

    x = x_ref[...]                                                  # (rows, k_in)
    h1 = batchnorm(conv3x3(x, t1_ref), g1_ref, b1_ref, relu=True)   # conv1+BN+ReLU
    h2 = batchnorm(conv3x3(h1, t2_ref), g2_ref, b2_ref, relu=False) # conv2+BN (zero_bn)
    idb = batchnorm(jnp.dot(x.astype(bf16), tid_ref[...],
                            preferred_element_type=f32),
                    gid_ref, bid_ref, relu=False)                   # idconv+BN
    o_ref[...] = jnp.maximum(h2 + idb, 0.0)          # residual add + final ReLU


# --------------------------------- wrapper ------------------------------------

@jax.jit
def res_block_forward(x_nchw, packed):
    n, ci, h, w = x_nchw.shape
    lanes = packed["g1"].shape[1]          # W * nf
    nf = lanes // w
    k_in = packed["tid"].shape[0]          # padded input lane count (>= W*ci)
    assert (nf & (nf - 1)) == 0 and (h & (h - 1)) == 0 and (w & (w - 1)) == 0, \
        "in-kernel row/lane reductions assume power-of-two C, H, W"

    # NCHW -> NHWC -> lane-dense rows (N*H, W*Cin), channel fastest on lanes;
    # pad the lane dim with zeros up to the (128-aligned) packed K.
    x_rows = (jnp.transpose(x_nchw, (0, 2, 3, 1))
              .astype(jnp.float32).reshape(n * h, w * ci))
    if k_in > w * ci:
        x_rows = jnp.pad(x_rows, ((0, 0), (0, k_in - w * ci)))

    operands = (x_rows, packed["t1"], packed["t2"], packed["tid"],
                packed["g1"], packed["b1"], packed["g2"], packed["b2"],
                packed["gid"], packed["bid"])

    out_rows = pl.pallas_call(
        functools.partial(_resblock_kernel, img_h=h, cout=nf),
        out_shape=jax.ShapeDtypeStruct((n * h, lanes), jnp.float32),
        grid=(1,),  # single block: whole working set (<0.5 MB) fits in VMEM
        in_specs=[_full_spec(op.shape) for op in operands],
        out_specs=_full_spec((n * h, lanes)),
        compiler_params=pltpu.CompilerParams(dimension_semantics=("arbitrary",)),
    )(*operands)

    # lane-dense rows -> NHWC -> NCHW
    return jnp.transpose(out_rows.reshape(n, h, w, nf), (0, 3, 1, 2))


# ------------------------------ params / reference ----------------------------

def init_params(key, ni, nh, expansion=1):
    nf, ni = nh * expansion, ni * expansion
    k1, k2, k3 = jax.random.split(key, 3)
    return {
        # conv weights in HWIO.
        "w1": 0.1 * jax.random.normal(k1, (3, 3, ni, nh), jnp.float32),
        "g1": jnp.ones((1, nh), jnp.float32),
        "b1": jnp.zeros((1, nh), jnp.float32),
        "w2": 0.1 * jax.random.normal(k2, (3, 3, nh, nf), jnp.float32),
        "g2": jnp.zeros((1, nf), jnp.float32),   # zero_bn init, as in the module
        "b2": jnp.zeros((1, nf), jnp.float32),
        "wid": 0.1 * jax.random.normal(k3, (1, 1, ni, nf), jnp.float32),
        "gid": jnp.ones((1, nf), jnp.float32),
        "bid": jnp.zeros((1, nf), jnp.float32),
    }


def _ref_conv_bn_nhwc(x, w4, gamma, beta, *, relu, quantize_bf16):
    if quantize_bf16:   # mimic bf16 MXU operands (f32 accumulation) of the kernel
        x = x.astype(jnp.bfloat16).astype(jnp.float32)
        w4 = jnp.asarray(w4).astype(jnp.bfloat16).astype(jnp.float32)
    y = jax.lax.conv_general_dilated(
        x, jnp.asarray(w4, jnp.float32), window_strides=(1, 1), padding="SAME",
        dimension_numbers=("NHWC", "HWIO", "NHWC"),
        precision=jax.lax.Precision.HIGHEST)
    mean = jnp.mean(y, axis=(0, 1, 2), keepdims=True)
    var = jnp.mean(jnp.square(y - mean), axis=(0, 1, 2), keepdims=True)
    out = ((y - mean) * jax.lax.rsqrt(var + EPS) * gamma.reshape(1, 1, 1, -1)
           + beta.reshape(1, 1, 1, -1))
    return jnp.maximum(out, 0.0) if relu else out


def ref_forward(x_nchw, params, *, quantize_bf16):
    x = jnp.transpose(x_nchw, (0, 2, 3, 1)).astype(jnp.float32)
    h = _ref_conv_bn_nhwc(x, params["w1"], params["g1"], params["b1"],
                          relu=True, quantize_bf16=quantize_bf16)
    h = _ref_conv_bn_nhwc(h, params["w2"], params["g2"], params["b2"],
                          relu=False, quantize_bf16=quantize_bf16)
    idb = _ref_conv_bn_nhwc(x, params["wid"], params["gid"], params["bid"],
                            relu=False, quantize_bf16=quantize_bf16)
    return jnp.transpose(jnp.maximum(h + idb, 0.0), (0, 3, 1, 2))


# ----------------------------------- main --------------------------------------

if __name__ == "__main__":
    key = jax.random.PRNGKey(0)
    kx, kp, kg, kb = jax.random.split(key, 4)

    # ResBlock(expansion=1, ni=4, nh=8, stride=1); input NCHW = (2, 4, 16, 16)
    N, C, H, W = 2, 4, 16, 16
    ni, nh, expansion = 4, 8, 1
    nf = nh * expansion

    x = jax.random.normal(kx, (N, C, H, W), jnp.float32)
    params = init_params(kp, ni, nh, expansion)
    packed = pack_params(params, W)          # one-time packing, reused per call

    out = jax.block_until_ready(res_block_forward(x, packed))
    assert out.shape == (N, nf, H, W)

    # Check 1: module-faithful params (zero_bn => conv2 branch contributes 0).
    #   tight: vs a reference that quantizes conv operands to bf16 (same math)
    #   loose: vs the pure f32 reference (bf16-MXU fidelity sanity check)
    np.testing.assert_allclose(
        np.asarray(out), np.asarray(ref_forward(x, params, quantize_bf16=True)),
        rtol=2e-3, atol=2e-3)
    np.testing.assert_allclose(
        np.asarray(out), np.asarray(ref_forward(x, params, quantize_bf16=False)),
        rtol=1e-1, atol=1e-1)

    # Check 2: perturb BN2 affine params so the conv1 -> conv2 path is actually
    # exercised end-to-end (with zero_bn it is exactly zeroed out).
    params2 = dict(params)
    params2["g2"] = 0.5 + 0.5 * jax.random.uniform(kg, (1, nf), jnp.float32)
    params2["b2"] = 0.1 * jax.random.normal(kb, (1, nf), jnp.float32)
    packed2 = pack_params(params2, W)
    out2 = jax.block_until_ready(res_block_forward(x, packed2))
    np.testing.assert_allclose(
        np.asarray(out2), np.asarray(ref_forward(x, params2, quantize_bf16=True)),
        rtol=2e-3, atol=2e-3)
    np.testing.assert_allclose(
        np.asarray(out2), np.asarray(ref_forward(x, params2, quantize_bf16=False)),
        rtol=1e-1, atol=1e-1)

    print("KERNEL_OK")
</pallas_src>

<mosaic_0001>
module attributes {stable_mosaic.version = 11 : i64} {
  func.func @_resblock_kernel(%arg0: i32, %arg1: memref<32x128xf32, #tpu.memory_space<vmem>>, %arg2: memref<384x128xbf16, #tpu.memory_space<vmem>>, %arg3: memref<384x128xbf16, #tpu.memory_space<vmem>>, %arg4: memref<128x128xbf16, #tpu.memory_space<vmem>>, %arg5: memref<1x128xf32, #tpu.memory_space<vmem>>, %arg6: memref<1x128xf32, #tpu.memory_space<vmem>>, %arg7: memref<1x128xf32, #tpu.memory_space<vmem>>, %arg8: memref<1x128xf32, #tpu.memory_space<vmem>>, %arg9: memref<1x128xf32, #tpu.memory_space<vmem>>, %arg10: memref<1x128xf32, #tpu.memory_space<vmem>>, %arg11: memref<32x128xf32, #tpu.memory_space<vmem>>) attributes {dimension_semantics = [#tpu.dimension_semantics<arbitrary>], iteration_bounds = array<i64: 1>, scalar_prefetch = 0 : i64, scratch_operands = 0 : i64, tpu.core_type = #tpu.core_type<tc>, window_params = [{pipeline_mode = #tpu.pipeline_mode<synchronous>, transform_indices = @transform_0, window_bounds = array<i64: 32, 128>}, {pipeline_mode = #tpu.pipeline_mode<synchronous>, transform_indices = @transform_1, window_bounds = array<i64: 384, 128>}, {pipeline_mode = #tpu.pipeline_mode<synchronous>, transform_indices = @transform_2, window_bounds = array<i64: 384, 128>}, {pipeline_mode = #tpu.pipeline_mode<synchronous>, transform_indices = @transform_3, window_bounds = array<i64: 128, 128>}, {pipeline_mode = #tpu.pipeline_mode<synchronous>, transform_indices = @transform_4, window_bounds = array<i64: 1, 128>}, {pipeline_mode = #tpu.pipeline_mode<synchronous>, transform_indices = @transform_5, window_bounds = array<i64: 1, 128>}, {pipeline_mode = #tpu.pipeline_mode<synchronous>, transform_indices = @transform_6, window_bounds = array<i64: 1, 128>}, {pipeline_mode = #tpu.pipeline_mode<synchronous>, transform_indices = @transform_7, window_bounds = array<i64: 1, 128>}, {pipeline_mode = #tpu.pipeline_mode<synchronous>, transform_indices = @transform_8, window_bounds = array<i64: 1, 128>}, {pipeline_mode = #tpu.pipeline_mode<synchronous>, transform_indices = @transform_9, window_bounds = array<i64: 1, 128>}, {pipeline_mode = #tpu.pipeline_mode<synchronous>, transform_indices = @transform_10, window_bounds = array<i64: 32, 128>}]} {
    %0 = tpu.iota {dimensions = array<i32: 0>} : vector<32x1xi32>
    %c15_i32 = arith.constant 15 : i32
    %1 = vector.broadcast %c15_i32 : i32 to vector<32x1xi32>
    %2 = arith.andi %0, %1 : vector<32x1xi32>
    %c0_i32 = arith.constant 0 : i32
    %3 = vector.broadcast %c0_i32 : i32 to vector<32x1xi32>
    %4 = arith.cmpi ne, %2, %3 : vector<32x1xi32>
    %5 = arith.extui %4 : vector<32x1xi1> to vector<32x1xi32>
    %6 = arith.sitofp %5 : vector<32x1xi32> to vector<32x1xf32>
    %c15_i32_0 = arith.constant 15 : i32
    %7 = vector.broadcast %c15_i32_0 : i32 to vector<32x1xi32>
    %8 = arith.cmpi ne, %2, %7 : vector<32x1xi32>
    %9 = arith.extui %8 : vector<32x1xi1> to vector<32x1xi32>
    %10 = arith.sitofp %9 : vector<32x1xi32> to vector<32x1xf32>
    %c0 = arith.constant 0 : index
    %c0_1 = arith.constant 0 : index
    %11 = vector.load %arg1[%c0, %c0_1] : memref<32x128xf32, #tpu.memory_space<vmem>>, vector<32x128xf32>
    %c1_i32 = arith.constant 1 : i32
    %12 = tpu.dynamic_rotate %11 by %c1_i32 dim 0 : vector<32x128xf32>, i32 -> vector<32x128xf32>
    %13 = vector.broadcast %6 : vector<32x1xf32> to vector<32x128xf32>
    %14 = arith.mulf %12, %13 : vector<32x128xf32>
    %c31_i32 = arith.constant 31 : i32
    %15 = tpu.dynamic_rotate %11 by %c31_i32 dim 0 : vector<32x128xf32>, i32 -> vector<32x128xf32>
    %16 = vector.broadcast %10 : vector<32x1xf32> to vector<32x128xf32>
    %17 = arith.mulf %15, %16 : vector<32x128xf32>
    %18 = tpu.concatenate %14, %11, %17 in 1 : vector<32x128xf32>, vector<32x128xf32>, vector<32x128xf32> -> vector<32x384xf32>
    %19 = arith.truncf %18 : vector<32x384xf32> to vector<32x384xbf16>
    %c0_2 = arith.constant 0 : index
    %c0_3 = arith.constant 0 : index
    %20 = vector.load %arg2[%c0_2, %c0_3] : memref<384x128xbf16, #tpu.memory_space<vmem>>, vector<384x128xbf16>
    %cst = arith.constant dense<0.000000e+00> : vector<32x128xf32>
    %21 = tpu.matmul %19, %20, %cst {dimension_numbers = #tpu.dot_dimension_numbers<[1], [0], [0], [1], [0, 0, 1, 1], [], []>} : vector<32x384xbf16>, vector<384x128xbf16>, vector<32x128xf32> -> vector<32x128xf32>
    %cst_4 = arith.constant dense<0.000000e+00> : vector<128xf32>
    %22 = vector.multi_reduction <add>, %21, %cst_4 [0] : vector<32x128xf32> to vector<128xf32>
    %23 = vector.shape_cast %22 : vector<128xf32> to vector<1x128xf32>
    %c8_i32 = arith.constant 8 : i32
    %24 = tpu.dynamic_rotate %23 by %c8_i32 dim 1 : vector<1x128xf32>, i32 -> vector<1x128xf32>
    %25 = arith.addf %23, %24 : vector<1x128xf32>
    %c16_i32 = arith.constant 16 : i32
    %26 = tpu.dynamic_rotate %25 by %c16_i32 dim 1 : vector<1x128xf32>, i32 -> vector<1x128xf32>
    %27 = arith.addf %25, %26 : vector<1x128xf32>
    %c32_i32 = arith.constant 32 : i32
    %28 = tpu.dynamic_rotate %27 by %c32_i32 dim 1 : vector<1x128xf32>, i32 -> vector<1x128xf32>
    %29 = arith.addf %27, %28 : vector<1x128xf32>
    %c64_i32 = arith.constant 64 : i32
    %30 = tpu.dynamic_rotate %29 by %c64_i32 dim 1 : vector<1x128xf32>, i32 -> vector<1x128xf32>
    %31 = arith.addf %29, %30 : vector<1x128xf32>
    %cst_5 = arith.constant 0.001953125 : f32
    %32 = vector.broadcast %cst_5 : f32 to vector<1x128xf32>
    %33 = arith.mulf %31, %32 : vector<1x128xf32>
    %34 = vector.broadcast %33 : vector<1x128xf32> to vector<32x128xf32>
    %35 = arith.subf %21, %34 : vector<32x128xf32>
    %36 = arith.mulf %35, %35 : vector<32x128xf32>
    %cst_6 = arith.constant dense<0.000000e+00> : vector<128xf32>
    %37 = vector.multi_reduction <add>, %36, %cst_6 [0] : vector<32x128xf32> to vector<128xf32>
    %38 = vector.shape_cast %37 : vector<128xf32> to vector<1x128xf32>
    %c8_i32_7 = arith.constant 8 : i32
    %39 = tpu.dynamic_rotate %38 by %c8_i32_7 dim 1 : vector<1x128xf32>, i32 -> vector<1x128xf32>
    %40 = arith.addf %38, %39 : vector<1x128xf32>
    %c16_i32_8 = arith.constant 16 : i32
    %41 = tpu.dynamic_rotate %40 by %c16_i32_8 dim 1 : vector<1x128xf32>, i32 -> vector<1x128xf32>
    %42 = arith.addf %40, %41 : vector<1x128xf32>
    %c32_i32_9 = arith.constant 32 : i32
    %43 = tpu.dynamic_rotate %42 by %c32_i32_9 dim 1 : vector<1x128xf32>, i32 -> vector<1x128xf32>
    %44 = arith.addf %42, %43 : vector<1x128xf32>
    %c64_i32_10 = arith.constant 64 : i32
    %45 = tpu.dynamic_rotate %44 by %c64_i32_10 dim 1 : vector<1x128xf32>, i32 -> vector<1x128xf32>
    %46 = arith.addf %44, %45 : vector<1x128xf32>
    %cst_11 = arith.constant 0.001953125 : f32
    %47 = vector.broadcast %cst_11 : f32 to vector<1x128xf32>
    %48 = arith.mulf %46, %47 : vector<1x128xf32>
    %c0_12 = arith.constant 0 : index
    %c0_13 = arith.constant 0 : index
    %49 = vector.load %arg5[%c0_12, %c0_13] : memref<1x128xf32, #tpu.memory_space<vmem>>, vector<1x128xf32>
    %cst_14 = arith.constant 9.99999974E-6 : f32
    %50 = vector.broadcast %cst_14 : f32 to vector<1x128xf32>
    %51 = arith.addf %48, %50 : vector<1x128xf32>
    %52 = math.rsqrt %51 : vector<1x128xf32>
    %53 = arith.mulf %49, %52 : vector<1x128xf32>
    %54 = vector.broadcast %53 : vector<1x128xf32> to vector<32x128xf32>
    %55 = arith.mulf %35, %54 : vector<32x128xf32>
    %c0_15 = arith.constant 0 : index
    %c0_16 = arith.constant 0 : index
    %56 = vector.load %arg6[%c0_15, %c0_16] : memref<1x128xf32, #tpu.memory_space<vmem>>, vector<1x128xf32>
    %57 = vector.broadcast %56 : vector<1x128xf32> to vector<32x128xf32>
    %58 = arith.addf %55, %57 : vector<32x128xf32>
    %cst_17 = arith.constant 0.000000e+00 : f32
    %59 = vector.broadcast %cst_17 : f32 to vector<32x128xf32>
    %60 = arith.maximumf %58, %59 : vector<32x128xf32>
    %c1_i32_18 = arith.constant 1 : i32
    %61 = tpu.dynamic_rotate %60 by %c1_i32_18 dim 0 : vector<32x128xf32>, i32 -> vector<32x128xf32>
    %62 = vector.broadcast %6 : vector<32x1xf32> to vector<32x128xf32>
    %63 = arith.mulf %61, %62 : vector<32x128xf32>
    %c31_i32_19 = arith.constant 31 : i32
    %64 = tpu.dynamic_rotate %60 by %c31_i32_19 dim 0 : vector<32x128xf32>, i32 -> vector<32x128xf32>
    %65 = vector.broadcast %10 : vector<32x1xf32> to vector<32x128xf32>
    %66 = arith.mulf %64, %65 : vector<32x128xf32>
    %67 = tpu.concatenate %63, %60, %66 in 1 : vector<32x128xf32>, vector<32x128xf32>, vector<32x128xf32> -> vector<32x384xf32>
    %68 = arith.truncf %67 : vector<32x384xf32> to vector<32x384xbf16>
    %c0_20 = arith.constant 0 : index
    %c0_21 = arith.constant 0 : index
    %69 = vector.load %arg3[%c0_20, %c0_21] : memref<384x128xbf16, #tpu.memory_space<vmem>>, vector<384x128xbf16>
    %cst_22 = arith.constant dense<0.000000e+00> : vector<32x128xf32>
    %70 = tpu.matmul %68, %69, %cst_22 {dimension_numbers = #tpu.dot_dimension_numbers<[1], [0], [0], [1], [0, 0, 1, 1], [], []>} : vector<32x384xbf16>, vector<384x128xbf16>, vector<32x128xf32> -> vector<32x128xf32>
    %cst_23 = arith.constant dense<0.000000e+00> : vector<128xf32>
    %71 = vector.multi_reduction <add>, %70, %cst_23 [0] : vector<32x128xf32> to vector<128xf32>
    %72 = vector.shape_cast %71 : vector<128xf32> to vector<1x128xf32>
    %c8_i32_24 = arith.constant 8 : i32
    %73 = tpu.dynamic_rotate %72 by %c8_i32_24 dim 1 : vector<1x128xf32>, i32 -> vector<1x128xf32>
    %74 = arith.addf %72, %73 : vector<1x128xf32>
    %c16_i32_25 = arith.constant 16 : i32
    %75 = tpu.dynamic_rotate %74 by %c16_i32_25 dim 1 : vector<1x128xf32>, i32 -> vector<1x128xf32>
    %76 = arith.addf %74, %75 : vector<1x128xf32>
    %c32_i32_26 = arith.constant 32 : i32
    %77 = tpu.dynamic_rotate %76 by %c32_i32_26 dim 1 : vector<1x128xf32>, i32 -> vector<1x128xf32>
    %78 = arith.addf %76, %77 : vector<1x128xf32>
    %c64_i32_27 = arith.constant 64 : i32
    %79 = tpu.dynamic_rotate %78 by %c64_i32_27 dim 1 : vector<1x128xf32>, i32 -> vector<1x128xf32>
    %80 = arith.addf %78, %79 : vector<1x128xf32>
    %cst_28 = arith.constant 0.001953125 : f32
    %81 = vector.broadcast %cst_28 : f32 to vector<1x128xf32>
    %82 = arith.mulf %80, %81 : vector<1x128xf32>
    %83 = vector.broadcast %82 : vector<1x128xf32> to vector<32x128xf32>
    %84 = arith.subf %70, %83 : vector<32x128xf32>
    %85 = arith.mulf %84, %84 : vector<32x128xf32>
    %cst_29 = arith.constant dense<0.000000e+00> : vector<128xf32>
    %86 = vector.multi_reduction <add>, %85, %cst_29 [0] : vector<32x128xf32> to vector<128xf32>
    %87 = vector.shape_cast %86 : vector<128xf32> to vector<1x128xf32>
    %c8_i32_30 = arith.constant 8 : i32
    %88 = tpu.dynamic_rotate %87 by %c8_i32_30 dim 1 : vector<1x128xf32>, i32 -> vector<1x128xf32>
    %89 = arith.addf %87, %88 : vector<1x128xf32>
    %c16_i32_31 = arith.constant 16 : i32
    %90 = tpu.dynamic_rotate %89 by %c16_i32_31 dim 1 : vector<1x128xf32>, i32 -> vector<1x128xf32>
    %91 = arith.addf %89, %90 : vector<1x128xf32>
    %c32_i32_32 = arith.constant 32 : i32
    %92 = tpu.dynamic_rotate %91 by %c32_i32_32 dim 1 : vector<1x128xf32>, i32 -> vector<1x128xf32>
    %93 = arith.addf %91, %92 : vector<1x128xf32>
    %c64_i32_33 = arith.constant 64 : i32
    %94 = tpu.dynamic_rotate %93 by %c64_i32_33 dim 1 : vector<1x128xf32>, i32 -> vector<1x128xf32>
    %95 = arith.addf %93, %94 : vector<1x128xf32>
    %cst_34 = arith.constant 0.001953125 : f32
    %96 = vector.broadcast %cst_34 : f32 to vector<1x128xf32>
    %97 = arith.mulf %95, %96 : vector<1x128xf32>
    %c0_35 = arith.constant 0 : index
    %c0_36 = arith.constant 0 : index
    %98 = vector.load %arg7[%c0_35, %c0_36] : memref<1x128xf32, #tpu.memory_space<vmem>>, vector<1x128xf32>
    %cst_37 = arith.constant 9.99999974E-6 : f32
    %99 = vector.broadcast %cst_37 : f32 to vector<1x128xf32>
    %100 = arith.addf %97, %99 : vector<1x128xf32>
    %101 = math.rsqrt %100 : vector<1x128xf32>
    %102 = arith.mulf %98, %101 : vector<1x128xf32>
    %103 = vector.broadcast %102 : vector<1x128xf32> to vector<32x128xf32>
    %104 = arith.mulf %84, %103 : vector<32x128xf32>
    %c0_38 = arith.constant 0 : index
    %c0_39 = arith.constant 0 : index
    %105 = vector.load %arg8[%c0_38, %c0_39] : memref<1x128xf32, #tpu.memory_space<vmem>>, vector<1x128xf32>
    %106 = vector.broadcast %105 : vector<1x128xf32> to vector<32x128xf32>
    %107 = arith.addf %104, %106 : vector<32x128xf32>
    %108 = arith.truncf %11 : vector<32x128xf32> to vector<32x128xbf16>
    %c0_40 = arith.constant 0 : index
    %c0_41 = arith.constant 0 : index
    %109 = vector.load %arg4[%c0_40, %c0_41] : memref<128x128xbf16, #tpu.memory_space<vmem>>, vector<128x128xbf16>
    %cst_42 = arith.constant dense<0.000000e+00> : vector<32x128xf32>
    %110 = tpu.matmul %108, %109, %cst_42 {dimension_numbers = #tpu.dot_dimension_numbers<[1], [0], [0], [1], [0, 0, 1, 1], [], []>} : vector<32x128xbf16>, vector<128x128xbf16>, vector<32x128xf32> -> vector<32x128xf32>
    %cst_43 = arith.constant dense<0.000000e+00> : vector<128xf32>
    %111 = vector.multi_reduction <add>, %110, %cst_43 [0] : vector<32x128xf32> to vector<128xf32>
    %112 = vector.shape_cast %111 : vector<128xf32> to vector<1x128xf32>
    %c8_i32_44 = arith.constant 8 : i32
    %113 = tpu.dynamic_rotate %112 by %c8_i32_44 dim 1 : vector<1x128xf32>, i32 -> vector<1x128xf32>
    %114 = arith.addf %112, %113 : vector<1x128xf32>
    %c16_i32_45 = arith.constant 16 : i32
    %115 = tpu.dynamic_rotate %114 by %c16_i32_45 dim 1 : vector<1x128xf32>, i32 -> vector<1x128xf32>
    %116 = arith.addf %114, %115 : vector<1x128xf32>
    %c32_i32_46 = arith.constant 32 : i32
    %117 = tpu.dynamic_rotate %116 by %c32_i32_46 dim 1 : vector<1x128xf32>, i32 -> vector<1x128xf32>
    %118 = arith.addf %116, %117 : vector<1x128xf32>
    %c64_i32_47 = arith.constant 64 : i32
    %119 = tpu.dynamic_rotate %118 by %c64_i32_47 dim 1 : vector<1x128xf32>, i32 -> vector<1x128xf32>
    %120 = arith.addf %118, %119 : vector<1x128xf32>
    %cst_48 = arith.constant 0.001953125 : f32
    %121 = vector.broadcast %cst_48 : f32 to vector<1x128xf32>
    %122 = arith.mulf %120, %121 : vector<1x128xf32>
    %123 = vector.broadcast %122 : vector<1x128xf32> to vector<32x128xf32>
    %124 = arith.subf %110, %123 : vector<32x128xf32>
    %125 = arith.mulf %124, %124 : vector<32x128xf32>
    %cst_49 = arith.constant dense<0.000000e+00> : vector<128xf32>
    %126 = vector.multi_reduction <add>, %125, %cst_49 [0] : vector<32x128xf32> to vector<128xf32>
    %127 = vector.shape_cast %126 : vector<128xf32> to vector<1x128xf32>
    %c8_i32_50 = arith.constant 8 : i32
    %128 = tpu.dynamic_rotate %127 by %c8_i32_50 dim 1 : vector<1x128xf32>, i32 -> vector<1x128xf32>
    %129 = arith.addf %127, %128 : vector<1x128xf32>
    %c16_i32_51 = arith.constant 16 : i32
    %130 = tpu.dynamic_rotate %129 by %c16_i32_51 dim 1 : vector<1x128xf32>, i32 -> vector<1x128xf32>
    %131 = arith.addf %129, %130 : vector<1x128xf32>
    %c32_i32_52 = arith.constant 32 : i32
    %132 = tpu.dynamic_rotate %131 by %c32_i32_52 dim 1 : vector<1x128xf32>, i32 -> vector<1x128xf32>
    %133 = arith.addf %131, %132 : vector<1x128xf32>
    %c64_i32_53 = arith.constant 64 : i32
    %134 = tpu.dynamic_rotate %133 by %c64_i32_53 dim 1 : vector<1x128xf32>, i32 -> vector<1x128xf32>
    %135 = arith.addf %133, %134 : vector<1x128xf32>
    %cst_54 = arith.constant 0.001953125 : f32
    %136 = vector.broadcast %cst_54 : f32 to vector<1x128xf32>
    %137 = arith.mulf %135, %136 : vector<1x128xf32>
    %c0_55 = arith.constant 0 : index
    %c0_56 = arith.constant 0 : index
    %138 = vector.load %arg9[%c0_55, %c0_56] : memref<1x128xf32, #tpu.memory_space<vmem>>, vector<1x128xf32>
    %cst_57 = arith.constant 9.99999974E-6 : f32
    %139 = vector.broadcast %cst_57 : f32 to vector<1x128xf32>
    %140 = arith.addf %137, %139 : vector<1x128xf32>
    %141 = math.rsqrt %140 : vector<1x128xf32>
    %142 = arith.mulf %138, %141 : vector<1x128xf32>
    %143 = vector.broadcast %142 : vector<1x128xf32> to vector<32x128xf32>
    %144 = arith.mulf %124, %143 : vector<32x128xf32>
    %c0_58 = arith.constant 0 : index
    %c0_59 = arith.constant 0 : index
    %145 = vector.load %arg10[%c0_58, %c0_59] : memref<1x128xf32, #tpu.memory_space<vmem>>, vector<1x128xf32>
    %146 = vector.broadcast %145 : vector<1x128xf32> to vector<32x128xf32>
    %147 = arith.addf %144, %146 : vector<32x128xf32>
    %148 = arith.addf %107, %147 : vector<32x128xf32>
    %cst_60 = arith.constant 0.000000e+00 : f32
    %149 = vector.broadcast %cst_60 : f32 to vector<32x128xf32>
    %150 = arith.maximumf %148, %149 : vector<32x128xf32>
    %c0_61 = arith.constant 0 : index
    %c0_62 = arith.constant 0 : index
    %151 = vector.load %arg11[%c0_61, %c0_62] : memref<32x128xf32, #tpu.memory_space<vmem>>, vector<32x128xf32>
    tpu.vector_store %arg11[%c0_61, %c0_62], %150 {strides = array<i32>} : memref<32x128xf32, #tpu.memory_space<vmem>>, vector<32x128xf32>,
    return
  }
  func.func @transform_0(%arg0: i32) -> (i32, i32) {
    %c0_i32 = arith.constant 0 : i32
    %c0_i32_0 = arith.constant 0 : i32
    %c0_i32_1 = arith.constant 0 : i32
    return %c0_i32, %c0_i32_0 : i32, i32
  }
  func.func @transform_1(%arg0: i32) -> (i32, i32) {
    %c0_i32 = arith.constant 0 : i32
    %c0_i32_0 = arith.constant 0 : i32
    %c0_i32_1 = arith.constant 0 : i32
    return %c0_i32, %c0_i32_0 : i32, i32
  }
  func.func @transform_2(%arg0: i32) -> (i32, i32) {
    %c0_i32 = arith.constant 0 : i32
    %c0_i32_0 = arith.constant 0 : i32
    %c0_i32_1 = arith.constant 0 : i32
    return %c0_i32, %c0_i32_0 : i32, i32
  }
  func.func @transform_3(%arg0: i32) -> (i32, i32) {
    %c0_i32 = arith.constant 0 : i32
    %c0_i32_0 = arith.constant 0 : i32
    %c0_i32_1 = arith.constant 0 : i32
    return %c0_i32, %c0_i32_0 : i32, i32
  }
  func.func @transform_4(%arg0: i32) -> (i32, i32) {
    %c0_i32 = arith.constant 0 : i32
    %c0_i32_0 = arith.constant 0 : i32
    %c0_i32_1 = arith.constant 0 : i32
    return %c0_i32, %c0_i32_0 : i32, i32
  }
  func.func @transform_5(%arg0: i32) -> (i32, i32) {
    %c0_i32 = arith.constant 0 : i32
    %c0_i32_0 = arith.constant 0 : i32
    %c0_i32_1 = arith.constant 0 : i32
    return %c0_i32, %c0_i32_0 : i32, i32
  }
  func.func @transform_6(%arg0: i32) -> (i32, i32) {
    %c0_i32 = arith.constant 0 : i32
    %c0_i32_0 = arith.constant 0 : i32
    %c0_i32_1 = arith.constant 0 : i32
    return %c0_i32, %c0_i32_0 : i32, i32
  }
  func.func @transform_7(%arg0: i32) -> (i32, i32) {
    %c0_i32 = arith.constant 0 : i32
    %c0_i32_0 = arith.constant 0 : i32
    %c0_i32_1 = arith.constant 0 : i32
    return %c0_i32, %c0_i32_0 : i32, i32
  }
  func.func @transform_8(%arg0: i32) -> (i32, i32) {
    %c0_i32 = arith.constant 0 : i32
    %c0_i32_0 = arith.constant 0 : i32
    %c0_i32_1 = arith.constant 0 : i32
    return %c0_i32, %c0_i32_0 : i32, i32
  }
  func.func @transform_9(%arg0: i32) -> (i32, i32) {
    %c0_i32 = arith.constant 0 : i32
    %c0_i32_0 = arith.constant 0 : i32
    %c0_i32_1 = arith.constant 0 : i32
    return %c0_i32, %c0_i32_0 : i32, i32
  }
  func.func @transform_10(%arg0: i32) -> (i32, i32) {
    %c0_i32 = arith.constant 0 : i32
    %c0_i32_0 = arith.constant 0 : i32
    %c0_i32_1 = arith.constant 0 : i32
    return %c0_i32, %c0_i32_0 : i32, i32
  }
}

</mosaic_0001>

<llo_original>
// kernel: res_block_forward.1
$region0: #{res_block_forward.1}
  #allocation0 [shape = 'u32[]', space=smem, size = 0x4, offset = 0x4, fixed_abs, tag = 'smem constant byte address 0x4 - core index']
  #allocation1 [shape = 'u32[72,128]{1,0:T(1,128)}', space=vmem, size = 0x9000, scoped, tag = 'internal scratch']
  %s0 = inlined_call_operand.vmem [shape: f32[32,128], index: 0, kind: input, shape index: {}]
  %s1 = inlined_call_operand.vmem [shape: bf16[384,128], index: 1, kind: input, shape index: {}]
  %s2 = inlined_call_operand.vmem [shape: bf16[384,128], index: 2, kind: input, shape index: {}]
  %s3 = inlined_call_operand.vmem [shape: bf16[128,128], index: 3, kind: input, shape index: {}]
  %s4 = inlined_call_operand.vmem [shape: f32[1,128], index: 4, kind: input, shape index: {}]
  %s5 = inlined_call_operand.vmem [shape: f32[1,128], index: 5, kind: input, shape index: {}]
  %s6 = inlined_call_operand.vmem [shape: f32[1,128], index: 6, kind: input, shape index: {}]
  %s7 = inlined_call_operand.vmem [shape: f32[1,128], index: 7, kind: input, shape index: {}]
  %s8 = inlined_call_operand.vmem [shape: f32[1,128], index: 8, kind: input, shape index: {}]
  %s9 = inlined_call_operand.vmem [shape: f32[1,128], index: 9, kind: input, shape index: {}]
  %s10 = inlined_call_operand.vmem [shape: f32[32,128], index: 10, kind: output, shape index: {}]
  %s11 = sld [smem:[#allocation0]]
  $region50: #{res_block_forward.1} parent=0
    _
  %s13 = ssub.s32 1, %s11
  %s14 = scalar_select 0, %s13, %s11
  // Predicated region
  $region2: #{res_block_forward.1} parent=0 // pred_check
    _
  $region3: #{res_block_forward.1} parent=0 // pred_check_branch
    %16 = sbr.rel (0) target = $region5
  $region4: #{res_block_forward.1} parent=0 // pred_region
    _
  $region5: #{res_block_forward.1} parent=0 // pred_fallthru
    _
  // Predicated region
  $region6: #{res_block_forward.1} parent=0 // pred_check
    _
  $region7: #{res_block_forward.1} parent=0 // pred_check_branch
    %18 = sbr.rel (0) target = $region9
  $region8: #{res_block_forward.1} parent=0 // pred_region
    _
  $region9: #{res_block_forward.1} parent=0 // pred_fallthru
    _
  // Predicated region
  $region10: #{res_block_forward.1} parent=0 // pred_check
    _
  $region11: #{res_block_forward.1} parent=0 // pred_check_branch
    %20 = sbr.rel (0) target = $region13
  $region12: #{res_block_forward.1} parent=0 // pred_region
    _
  $region13: #{res_block_forward.1} parent=0 // pred_fallthru
    _
  // Predicated region
  $region14: #{res_block_forward.1} parent=0 // pred_check
    _
  $region15: #{res_block_forward.1} parent=0 // pred_check_branch
    %22 = sbr.rel (0) target = $region17
  $region16: #{res_block_forward.1} parent=0 // pred_region
    _
  $region17: #{res_block_forward.1} parent=0 // pred_fallthru
    _
  // Predicated region
  $region18: #{res_block_forward.1} parent=0 // pred_check
    _
  $region19: #{res_block_forward.1} parent=0 // pred_check_branch
    %24 = sbr.rel (0) target = $region21
  $region20: #{res_block_forward.1} parent=0 // pred_region
    _
  $region21: #{res_block_forward.1} parent=0 // pred_fallthru
    _
  // Predicated region
  $region22: #{res_block_forward.1} parent=0 // pred_check
    _
  $region23: #{res_block_forward.1} parent=0 // pred_check_branch
    %26 = sbr.rel (0) target = $region25
  $region24: #{res_block_forward.1} parent=0 // pred_region
    _
  $region25: #{res_block_forward.1} parent=0 // pred_fallthru
    _
  // Predicated region
  $region26: #{res_block_forward.1} parent=0 // pred_check
    _
  $region27: #{res_block_forward.1} parent=0 // pred_check_branch
    %28 = sbr.rel (0) target = $region29
  $region28: #{res_block_forward.1} parent=0 // pred_region
    _
  $region29: #{res_block_forward.1} parent=0 // pred_fallthru
    _
  // Predicated region
  $region30: #{res_block_forward.1} parent=0 // pred_check
    _
  $region31: #{res_block_forward.1} parent=0 // pred_check_branch
    %30 = sbr.rel (0) target = $region33
  $region32: #{res_block_forward.1} parent=0 // pred_region
    _
  $region33: #{res_block_forward.1} parent=0 // pred_fallthru
    _
  // Predicated region
  $region34: #{res_block_forward.1} parent=0 // pred_check
    _
  $region35: #{res_block_forward.1} parent=0 // pred_check_branch
    %32 = sbr.rel (0) target = $region37
  $region36: #{res_block_forward.1} parent=0 // pred_region
    _
  $region37: #{res_block_forward.1} parent=0 // pred_fallthru
    _
  // Predicated region
  $region38: #{res_block_forward.1} parent=0 // pred_check
    _
  $region39: #{res_block_forward.1} parent=0 // pred_check_branch
    %34 = sbr.rel (0) target = $region41
  $region40: #{res_block_forward.1} parent=0 // pred_region
    _
  $region41: #{res_block_forward.1} parent=0 // pred_fallthru
    _
  %v35 = vlaneseq
  %v36 = vshrl.u32 %v35, 7
  %v37 = vadd.s32 %v36, 8
  %v38 = vadd.s32 %v36, 16
  %v39 = vadd.s32 %v36, 24
  %v40 = vand.u32 %v36, 15
  %v41 = vand.u32 %v37, 15
  %v42 = vand.u32 %v38, 15
  %v43 = vand.u32 %v39, 15
  %vm44 = vcmp.ne.s32.totalorder %v40, 0
  %vm45 = vcmp.ne.s32.totalorder %v41, 0
  %vm46 = vcmp.ne.s32.totalorder %v42, 0
  %vm47 = vcmp.ne.s32.totalorder %v43, 0
  %v48 = vsel %vm44, 1, 0
  %v49 = vsel %vm45, 1, 0
  %v50 = vsel %vm46, 1, 0
  %v51 = vsel %vm47, 1, 0
  %v52 = vcvt.s32.f32 %v48
  %v53 = vcvt.s32.f32 %v49
  %v54 = vcvt.s32.f32 %v50
  %v55 = vcvt.s32.f32 %v51
  %vm56 = vcmp.ne.s32.totalorder %v40, 15
  %vm57 = vcmp.ne.s32.totalorder %v41, 15
  %vm58 = vcmp.ne.s32.totalorder %v42, 15
  %vm59 = vcmp.ne.s32.totalorder %v43, 15
  %v60 = vsel %vm56, 1, 0
  %v61 = vsel %vm57, 1, 0
  %v62 = vsel %vm58, 1, 0
  %v63 = vsel %vm59, 1, 0
  %v64 = vcvt.s32.f32 %v60
  %v65 = vcvt.s32.f32 %v61
  %v66 = vcvt.s32.f32 %v62
  %v67 = vcvt.s32.f32 %v63
  %v68 = vld [vmem:[%s0] sm:$0xff]
  %v69 = vld [vmem:[%s0 + $0x8] sm:$0xff]
  %v70 = vld [vmem:[%s0 + $0x10] sm:$0xff]
  %v71 = vld [vmem:[%s0 + $0x18] sm:$0xff]
  %v72 = vrot.slane %v68, 7
  %v73 = vrot.slane %v69, 7
  %v74 = vrot.slane %v70, 7
  %v75 = vrot.slane %v71, 7
  %vm76 = vcmp.lt.s32.totalorder %v36, 1
  %v77 = vsel %vm76, %v74, %v75
  %v78 = vsel %vm76, %v73, %v74
  %v79 = vsel %vm76, %v72, %v73
  %v80 = vsel %vm76, %v75, %v72
  %v81 = vmul.f32 %v80, %v52
  %v82 = vmul.f32 %v79, %v53
  %v83 = vmul.f32 %v78, %v54
  %v84 = vmul.f32 %v77, %v55
  %v85 = vrot.slane %v68, 1
  %v86 = vrot.slane %v69, 1
  %v87 = vrot.slane %v70, 1
  %v88 = vrot.slane %v71, 1
  %vm89 = vcmp.lt.s32.totalorder %v36, 7
  %v90 = vsel %vm89, %v87, %v88
  %v91 = vsel %vm89, %v86, %v87
  %v92 = vsel %vm89, %v85, %v86
  %v93 = vsel %vm89, %v88, %v85
  %v94 = vmul.f32 %v92, %v64
  %v95 = vmul.f32 %v91, %v65
  %v96 = vmul.f32 %v90, %v66
  %v97 = vmul.f32 %v93, %v67
  %v98 = vpack.c.bf16 %v82, %v81
  %v99 = vpack.c.bf16 %v69, %v68
  %v100 = vpack.c.bf16 %v95, %v94
  %v101 = vpack.c.bf16 %v84, %v83
  %v102 = vpack.c.bf16 %v71, %v70
  %v103 = vpack.c.bf16 %v97, %v96
  %v104 = vld [vmem:[%s1] sm:$0xf]
  %v105 = vld [vmem:[%s1 + $0x4] sm:$0xf]
  %v106 = vld [vmem:[%s1 + $0x8] sm:$0xf]
  %v107 = vld [vmem:[%s1 + $0xc] sm:$0xf]
  %v108 = vld [vmem:[%s1 + $0x10] sm:$0xf]
  %v109 = vld [vmem:[%s1 + $0x14] sm:$0xf]
  %v110 = vld [vmem:[%s1 + $0x18] sm:$0xf]
  %v111 = vld [vmem:[%s1 + $0x1c] sm:$0xf]
  %v112 = vld [vmem:[%s1 + $0x20] sm:$0xf]
  %v113 = vld [vmem:[%s1 + $0x24] sm:$0xf]
  %v114 = vld [vmem:[%s1 + $0x28] sm:$0xf]
  %v115 = vld [vmem:[%s1 + $0x2c] sm:$0xf]
  %v116 = vld [vmem:[%s1 + $0x30] sm:$0xf]
  %v117 = vld [vmem:[%s1 + $0x34] sm:$0xf]
  %v118 = vld [vmem:[%s1 + $0x38] sm:$0xf]
  %v119 = vld [vmem:[%s1 + $0x3c] sm:$0xf]
  %v120 = vld [vmem:[%s1 + $0x40] sm:$0xf]
  %v121 = vld [vmem:[%s1 + $0x44] sm:$0xf]
  %v122 = vld [vmem:[%s1 + $0x48] sm:$0xf]
  %v123 = vld [vmem:[%s1 + $0x4c] sm:$0xf]
  %v124 = vld [vmem:[%s1 + $0x50] sm:$0xf]
  %v125 = vld [vmem:[%s1 + $0x54] sm:$0xf]
  %v126 = vld [vmem:[%s1 + $0x58] sm:$0xf]
  %v127 = vld [vmem:[%s1 + $0x5c] sm:$0xf]
  %v128 = vld [vmem:[%s1 + $0x60] sm:$0xf]
  %v129 = vld [vmem:[%s1 + $0x64] sm:$0xf]
  %v130 = vld [vmem:[%s1 + $0x68] sm:$0xf]
  %v131 = vld [vmem:[%s1 + $0x6c] sm:$0xf]
  %v132 = vld [vmem:[%s1 + $0x70] sm:$0xf]
  %v133 = vld [vmem:[%s1 + $0x74] sm:$0xf]
  %v134 = vld [vmem:[%s1 + $0x78] sm:$0xf]
  %v135 = vld [vmem:[%s1 + $0x7c] sm:$0xf]
  %v136 = vld [vmem:[%s1 + $0x80] sm:$0xf]
  %v137 = vld [vmem:[%s1 + $0x84] sm:$0xf]
  %v138 = vld [vmem:[%s1 + $0x88] sm:$0xf]
  %v139 = vld [vmem:[%s1 + $0x8c] sm:$0xf]
  %v140 = vld [vmem:[%s1 + $0x90] sm:$0xf]
  %v141 = vld [vmem:[%s1 + $0x94] sm:$0xf]
  %v142 = vld [vmem:[%s1 + $0x98] sm:$0xf]
  %v143 = vld [vmem:[%s1 + $0x9c] sm:$0xf]
  %v144 = vld [vmem:[%s1 + $0xa0] sm:$0xf]
  %v145 = vld [vmem:[%s1 + $0xa4] sm:$0xf]
  %v146 = vld [vmem:[%s1 + $0xa8] sm:$0xf]
  %v147 = vld [vmem:[%s1 + $0xac] sm:$0xf]
  %v148 = vld [vmem:[%s1 + $0xb0] sm:$0xf]
  %v149 = vld [vmem:[%s1 + $0xb4] sm:$0xf]
  %v150 = vld [vmem:[%s1 + $0xb8] sm:$0xf]
  %v151 = vld [vmem:[%s1 + $0xbc] sm:$0xf]
  %v200 = vunpack.c.l.b16 %v104
  %v201 = vunpack.c.l.b16 %v105
  %v202 = vunpack.c.l.b16 %v106
  %v203 = vunpack.c.l.b16 %v107
  %v204 = vunpack.c.l.b16 %v108
  %v205 = vunpack.c.l.b16 %v109
  %v206 = vunpack.c.l.b16 %v110
  %v207 = vunpack.c.l.b16 %v111
  %v208 = vunpack.c.l.b16 %v112
  %v209 = vunpack.c.l.b16 %v113
  %v210 = vunpack.c.l.b16 %v114
  %v211 = vunpack.c.l.b16 %v115
  %v212 = vunpack.c.l.b16 %v116
  %v213 = vunpack.c.l.b16 %v117
  %v214 = vunpack.c.l.b16 %v118
  %v215 = vunpack.c.l.b16 %v119
  %v216 = vunpack.c.l.b16 %v120
  %v217 = vunpack.c.l.b16 %v121
  %v218 = vunpack.c.l.b16 %v122
  %v219 = vunpack.c.l.b16 %v123
  %v220 = vunpack.c.l.b16 %v124
  %v221 = vunpack.c.l.b16 %v125
  %v222 = vunpack.c.l.b16 %v126
  %v223 = vunpack.c.l.b16 %v127
  %v224 = vunpack.c.l.b16 %v128
  %v225 = vunpack.c.l.b16 %v129
  %v226 = vunpack.c.l.b16 %v130
  %v227 = vunpack.c.l.b16 %v131
  %v228 = vunpack.c.l.b16 %v132
  %v229 = vunpack.c.l.b16 %v133
  %v230 = vunpack.c.l.b16 %v134
  %v231 = vunpack.c.l.b16 %v135
  %v232 = vunpack.c.l.b16 %v136
  %v233 = vunpack.c.l.b16 %v137
  %v234 = vunpack.c.l.b16 %v138
  %v235 = vunpack.c.l.b16 %v139
  %v236 = vunpack.c.l.b16 %v140
  %v237 = vunpack.c.l.b16 %v141
  %v238 = vunpack.c.l.b16 %v142
  %v239 = vunpack.c.l.b16 %v143
  %v240 = vunpack.c.l.b16 %v144
  %v241 = vunpack.c.l.b16 %v145
  %v242 = vunpack.c.l.b16 %v146
  %v243 = vunpack.c.l.b16 %v147
  %v244 = vunpack.c.l.b16 %v148
  %v245 = vunpack.c.l.b16 %v149
  %v246 = vunpack.c.l.b16 %v150
  %v247 = vunpack.c.l.b16 %v151
  %v248 = vpack.c.b16 %v201, %v200
  %v249 = vpack.c.b16 %v203, %v202
  %v250 = vpack.c.b16 %v205, %v204
  %v251 = vpack.c.b16 %v207, %v206
  %v252 = vpack.c.b16 %v209, %v208
  %v253 = vpack.c.b16 %v211, %v210
  %v254 = vpack.c.b16 %v213, %v212
  %v255 = vpack.c.b16 %v215, %v214
  %v256 = vpack.c.b16 %v217, %v216
  %v257 = vpack.c.b16 %v219, %v218
  %v258 = vpack.c.b16 %v221, %v220
  %v259 = vpack.c.b16 %v223, %v222
  %v260 = vpack.c.b16 %v225, %v224
  %v261 = vpack.c.b16 %v227, %v226
  %v262 = vpack.c.b16 %v229, %v228
  %v263 = vpack.c.b16 %v231, %v230
  %v264 = vpack.c.b16 %v233, %v232
  %v265 = vpack.c.b16 %v235, %v234
  %v266 = vpack.c.b16 %v237, %v236
  %v267 = vpack.c.b16 %v239, %v238
  %v268 = vpack.c.b16 %v241, %v240
  %v269 = vpack.c.b16 %v243, %v242
  %v270 = vpack.c.b16 %v245, %v244
  %v271 = vpack.c.b16 %v247, %v246
  %296 = vmatpush.bf16.msra.mxu0 %v255
  %297 = vmatpush.bf16.msra.mxu0 %v254
  %298 = vmatpush.bf16.msra.mxu0 %v253
  %299 = vmatpush.bf16.msra.mxu0 %v252
  %300 = vmatpush.bf16.msra.mxu0 %v251
  %301 = vmatpush.bf16.msra.mxu0 %v250
  %302 = vmatpush.bf16.msra.mxu0 %v249
  %303 = vmatpush.bf16.msra.mxu0 %v248
  %304 = vmatmul.bf16.gmra.mxu0 %v98
  %v305 = vpop.f32.mrf.mxu0
  %v306 = vadd.f32 0.0, %v305
  %v307 = vpop.f32.mrf.mxu0
  %v308 = vadd.f32 0.0, %v307
  %309 = vmatmul.bf16.gmra.mxu0 %v101
  %v310 = vpop.f32.mrf.mxu0
  %v311 = vadd.f32 0.0, %v310
  %v312 = vpop.f32.mrf.mxu0
  %v313 = vadd.f32 0.0, %v312
  %314 = vdwg.mxu0
  %315 = vmatpush.bf16.msra.mxu0 %v263
  %316 = vmatpush.bf16.msra.mxu0 %v262
  %317 = vmatpush.bf16.msra.mxu0 %v261
  %318 = vmatpush.bf16.msra.mxu0 %v260
  %319 = vmatpush.bf16.msra.mxu0 %v259
  %320 = vmatpush.bf16.msra.mxu0 %v258
  %321 = vmatpush.bf16.msra.mxu0 %v257
  %322 = vmatpush.bf16.msra.mxu0 %v256
  %323 = vmatmul.bf16.gmra.mxu0 %v99
  %v324 = vpop.f32.mrf.mxu0
  %v325 = vadd.f32 %v306, %v324
  %v326 = vpop.f32.mrf.mxu0
  %v327 = vadd.f32 %v308, %v326
  %328 = vmatmul.bf16.gmra.mxu0 %v102
  %v329 = vpop.f32.mrf.mxu0
  %v330 = vadd.f32 %v311, %v329
  %v331 = vpop.f32.mrf.mxu0
  %v332 = vadd.f32 %v313, %v331
  %333 = vdwg.mxu0
  %334 = vmatpush.bf16.msra.mxu0 %v271
  %335 = vmatpush.bf16.msra.mxu0 %v270
  %336 = vmatpush.bf16.msra.mxu0 %v269
  %337 = vmatpush.bf16.msra.mxu0 %v268
  %338 = vmatpush.bf16.msra.mxu0 %v267
  %339 = vmatpush.bf16.msra.mxu0 %v266
  %340 = vmatpush.bf16.msra.mxu0 %v265
  %341 = vmatpush.bf16.msra.mxu0 %v264
  %342 = vmatmul.bf16.gmra.mxu0 %v100
  %v343 = vpop.f32.mrf.mxu0
  %v344 = vadd.f32 %v325, %v343
  %v345 = vpop.f32.mrf.mxu0
  %v346 = vadd.f32 %v327, %v345
  %347 = vmatmul.bf16.gmra.mxu0 %v103
  %v348 = vpop.f32.mrf.mxu0
  %v349 = vadd.f32 %v330, %v348
  %v350 = vpop.f32.mrf.mxu0
  %v351 = vadd.f32 %v332, %v350
  %352 = vdwg.mxu0
  %v353 = vadd.f32 %v344, %v346
  %v354 = vadd.f32 %v353, %v349
  %v355 = vadd.f32 %v354, %v351
  %v356 = vrot.slane %v355, 4
  %v357 = vadd.f32 %v355, %v356
  %v358 = vrot.slane %v357, 2
  %v359 = vadd.f32 %v357, %v358
  %v360 = vrot.slane %v359, 1
  %v361 = vadd.f32 %v359, %v360
  %362 = vrot.lane.b32.xlu0 %v361, 8
  %v363 = vpop.permute.xlu0 %362
  %v364 = vadd.f32 %v361, %v363
  %365 = vrot.lane.b32.xlu0 %v364, 16
  %v366 = vpop.permute.xlu0 %365
  %v367 = vadd.f32 %v364, %v366
  %368 = vrot.lane.b32.xlu0 %v367, 32
  %v369 = vpop.permute.xlu0 %368
  %v370 = vadd.f32 %v367, %v369
  %371 = vrot.lane.b32.xlu0 %v370, 64
  %v372 = vpop.permute.xlu0 %371
  %v373 = vadd.f32 %v370, %v372
  %v374 = vmul.f32 %v373, 0.001953125
  %v375 = vperm.slane %v374, 0
  %v376 = vsub.f32 %v344, %v375
  %v377 = vsub.f32 %v346, %v375
  %v378 = vsub.f32 %v349, %v375
  %v379 = vsub.f32 %v351, %v375
  %v380 = vmul.f32 %v376, %v376
  %v381 = vmul.f32 %v377, %v377
  %v382 = vmul.f32 %v378, %v378
  %v383 = vmul.f32 %v379, %v379
  %v384 = vadd.f32 %v380, %v381
  %v385 = vadd.f32 %v384, %v382
  %v386 = vadd.f32 %v385, %v383
  %v387 = vrot.slane %v386, 4
  %v388 = vadd.f32 %v386, %v387
  %v389 = vrot.slane %v388, 2
  %v390 = vadd.f32 %v388, %v389
  %v391 = vrot.slane %v390, 1
  %v392 = vadd.f32 %v390, %v391
  %393 = vrot.lane.b32.xlu0 %v392, 8
  %v394 = vpop.permute.xlu0 %393
  %v395 = vadd.f32 %v392, %v394
  %396 = vrot.lane.b32.xlu0 %v395, 16
  %v397 = vpop.permute.xlu0 %396
  %v398 = vadd.f32 %v395, %v397
  %399 = vrot.lane.b32.xlu0 %v398, 32
  %v400 = vpop.permute.xlu0 %399
  %v401 = vadd.f32 %v398, %v400
  %402 = vrot.lane.b32.xlu0 %v401, 64
  %v403 = vpop.permute.xlu0 %402
  %v404 = vadd.f32 %v401, %v403
  %v405 = vmul.f32 %v404, 0.001953125
  %v406 = vld [vmem:[%s4] sm:$0x1]
  %v407 = vadd.f32 %v405, 1e-05
  %v408 = vrsqrt.pop %v407
  %v409 = vmul.f32 %v408, %v407
  %v410 = vmul.f32 %v409, %v408
  %v411 = vmul.f32 0.5, %v410
  %v412 = vsub.f32 1.5, %v411
  %v413 = vmul.f32 %v408, %v412
  %vm414 = vweird.f32 %v407
  %vm415 = vweird.f32 %v408
  %vm416 = vmor %vm414, %vm415
  %v417 = vsel %vm416, %v408, %v413
  %v418 = vmul.f32 %v406, %v417
  %v420 = vperm.slane %v418, 0
  %v422 = vmul.f32 %v376, %v420
  %v423 = vmul.f32 %v377, %v420
  %v424 = vmul.f32 %v378, %v420
  %v425 = vmul.f32 %v379, %v420
  %v426 = vld [vmem:[%s5] sm:$0x1]
  %v428 = vperm.slane %v426, 0
  %v430 = vadd.f32 %v422, %v428
  %v431 = vadd.f32 %v423, %v428
  %v432 = vadd.f32 %v424, %v428
  %v433 = vadd.f32 %v425, %v428
  %v434 = vmax.f32 %v430, 0.0
  %v435 = vmax.f32 %v431, 0.0
  %v436 = vmax.f32 %v432, 0.0
  %v437 = vmax.f32 %v433, 0.0
  %v438 = vrot.slane %v434, 7
  %v439 = vrot.slane %v435, 7
  %v440 = vrot.slane %v436, 7
  %v441 = vrot.slane %v437, 7
  %v442 = vsel %vm76, %v440, %v441
  %v443 = vsel %vm76, %v439, %v440
  %v444 = vsel %vm76, %v438, %v439
  %v445 = vsel %vm76, %v441, %v438
  %v446 = vmul.f32 %v445, %v52
  %v447 = vmul.f32 %v444, %v53
  %v448 = vmul.f32 %v443, %v54
  %v449 = vmul.f32 %v442, %v55
  %v450 = vrot.slane %v434, 1
  %v451 = vrot.slane %v435, 1
  %v452 = vrot.slane %v436, 1
  %v453 = vrot.slane %v437, 1
  %v454 = vsel %vm89, %v452, %v453
  %v455 = vsel %vm89, %v451, %v452
  %v456 = vsel %vm89, %v450, %v451
  %v457 = vsel %vm89, %v453, %v450
  %v458 = vmul.f32 %v456, %v64
  %v459 = vmul.f32 %v455, %v65
  %v460 = vmul.f32 %v454, %v66
  %v461 = vmul.f32 %v457, %v67
  %v462 = vpack.c.bf16 %v447, %v446
  %v463 = vpack.c.bf16 %v435, %v434
  %v464 = vpack.c.bf16 %v459, %v458
  %v465 = vpack.c.bf16 %v449, %v448
  %v466 = vpack.c.bf16 %v437, %v436
  %v467 = vpack.c.bf16 %v461, %v460
  %v468 = vld [vmem:[%s2] sm:$0xf]
  %v469 = vld [vmem:[%s2 + $0x4] sm:$0xf]
  %v470 = vld [vmem:[%s2 + $0x8] sm:$0xf]
  %v471 = vld [vmem:[%s2 + $0xc] sm:$0xf]
  %v472 = vld [vmem:[%s2 + $0x10] sm:$0xf]
  %v473 = vld [vmem:[%s2 + $0x14] sm:$0xf]
  %v474 = vld [vmem:[%s2 + $0x18] sm:$0xf]
  %v475 = vld [vmem:[%s2 + $0x1c] sm:$0xf]
  %v476 = vld [vmem:[%s2 + $0x20] sm:$0xf]
  %v477 = vld [vmem:[%s2 + $0x24] sm:$0xf]
  %v478 = vld [vmem:[%s2 + $0x28] sm:$0xf]
  %v479 = vld [vmem:[%s2 + $0x2c] sm:$0xf]
  %v480 = vld [vmem:[%s2 + $0x30] sm:$0xf]
  %v481 = vld [vmem:[%s2 + $0x34] sm:$0xf]
  %v482 = vld [vmem:[%s2 + $0x38] sm:$0xf]
  %v483 = vld [vmem:[%s2 + $0x3c] sm:$0xf]
  %v484 = vld [vmem:[%s2 + $0x40] sm:$0xf]
  %v485 = vld [vmem:[%s2 + $0x44] sm:$0xf]
  %v486 = vld [vmem:[%s2 + $0x48] sm:$0xf]
  %v487 = vld [vmem:[%s2 + $0x4c] sm:$0xf]
  %v488 = vld [vmem:[%s2 + $0x50] sm:$0xf]
  %v489 = vld [vmem:[%s2 + $0x54] sm:$0xf]
  %v490 = vld [vmem:[%s2 + $0x58] sm:$0xf]
  %v491 = vld [vmem:[%s2 + $0x5c] sm:$0xf]
  %v492 = vld [vmem:[%s2 + $0x60] sm:$0xf]
  %v493 = vld [vmem:[%s2 + $0x64] sm:$0xf]
  %v494 = vld [vmem:[%s2 + $0x68] sm:$0xf]
  %v495 = vld [vmem:[%s2 + $0x6c] sm:$0xf]
  %v496 = vld [vmem:[%s2 + $0x70] sm:$0xf]
  %v497 = vld [vmem:[%s2 + $0x74] sm:$0xf]
  %v498 = vld [vmem:[%s2 + $0x78] sm:$0xf]
  %v499 = vld [vmem:[%s2 + $0x7c] sm:$0xf]
  %v500 = vld [vmem:[%s2 + $0x80] sm:$0xf]
  %v501 = vld [vmem:[%s2 + $0x84] sm:$0xf]
  %v502 = vld [vmem:[%s2 + $0x88] sm:$0xf]
  %v503 = vld [vmem:[%s2 + $0x8c] sm:$0xf]
  %v504 = vld [vmem:[%s2 + $0x90] sm:$0xf]
  %v505 = vld [vmem:[%s2 + $0x94] sm:$0xf]
  %v506 = vld [vmem:[%s2 + $0x98] sm:$0xf]
  %v507 = vld [vmem:[%s2 + $0x9c] sm:$0xf]
  %v508 = vld [vmem:[%s2 + $0xa0] sm:$0xf]
  %v509 = vld [vmem:[%s2 + $0xa4] sm:$0xf]
  %v510 = vld [vmem:[%s2 + $0xa8] sm:$0xf]
  %v511 = vld [vmem:[%s2 + $0xac] sm:$0xf]
  %v512 = vld [vmem:[%s2 + $0xb0] sm:$0xf]
  %v513 = vld [vmem:[%s2 + $0xb4] sm:$0xf]
  %v514 = vld [vmem:[%s2 + $0xb8] sm:$0xf]
  %v515 = vld [vmem:[%s2 + $0xbc] sm:$0xf]
  %v564 = vunpack.c.l.b16 %v468
  %v565 = vunpack.c.l.b16 %v469
  %v566 = vunpack.c.l.b16 %v470
  %v567 = vunpack.c.l.b16 %v471
  %v568 = vunpack.c.l.b16 %v472
  %v569 = vunpack.c.l.b16 %v473
  %v570 = vunpack.c.l.b16 %v474
  %v571 = vunpack.c.l.b16 %v475
  %v572 = vunpack.c.l.b16 %v476
  %v573 = vunpack.c.l.b16 %v477
  %v574 = vunpack.c.l.b16 %v478
  %v575 = vunpack.c.l.b16 %v479
  %v576 = vunpack.c.l.b16 %v480
  %v577 = vunpack.c.l.b16 %v481
  %v578 = vunpack.c.l.b16 %v482
  %v579 = vunpack.c.l.b16 %v483
  %v580 = vunpack.c.l.b16 %v484
  %v581 = vunpack.c.l.b16 %v485
  %v582 = vunpack.c.l.b16 %v486
  %v583 = vunpack.c.l.b16 %v487
  %v584 = vunpack.c.l.b16 %v488
  %v585 = vunpack.c.l.b16 %v489
  %v586 = vunpack.c.l.b16 %v490
  %v587 = vunpack.c.l.b16 %v491
  %v588 = vunpack.c.l.b16 %v492
  %v589 = vunpack.c.l.b16 %v493
  %v590 = vunpack.c.l.b16 %v494
  %v591 = vunpack.c.l.b16 %v495
  %v592 = vunpack.c.l.b16 %v496
  %v593 = vunpack.c.l.b16 %v497
  %v594 = vunpack.c.l.b16 %v498
  %v595 = vunpack.c.l.b16 %v499
  %v596 = vunpack.c.l.b16 %v500
  %v597 = vunpack.c.l.b16 %v501
  %v598 = vunpack.c.l.b16 %v502
  %v599 = vunpack.c.l.b16 %v503
  %v600 = vunpack.c.l.b16 %v504
  %v601 = vunpack.c.l.b16 %v505
  %v602 = vunpack.c.l.b16 %v506
  %v603 = vunpack.c.l.b16 %v507
  %v604 = vunpack.c.l.b16 %v508
  %v605 = vunpack.c.l.b16 %v509
  %v606 = vunpack.c.l.b16 %v510
  %v607 = vunpack.c.l.b16 %v511
  %v608 = vunpack.c.l.b16 %v512
  %v609 = vunpack.c.l.b16 %v513
  %v610 = vunpack.c.l.b16 %v514
  %v611 = vunpack.c.l.b16 %v515
  %v612 = vpack.c.b16 %v565, %v564
  %v613 = vpack.c.b16 %v567, %v566
  %v614 = vpack.c.b16 %v569, %v568
  %v615 = vpack.c.b16 %v571, %v570
  %v616 = vpack.c.b16 %v573, %v572
  %v617 = vpack.c.b16 %v575, %v574
  %v618 = vpack.c.b16 %v577, %v576
  %v619 = vpack.c.b16 %v579, %v578
  %v620 = vpack.c.b16 %v581, %v580
  %v621 = vpack.c.b16 %v583, %v582
  %v622 = vpack.c.b16 %v585, %v584
  %v623 = vpack.c.b16 %v587, %v586
  %v624 = vpack.c.b16 %v589, %v588
  %v625 = vpack.c.b16 %v591, %v590
  %v626 = vpack.c.b16 %v593, %v592
  %v627 = vpack.c.b16 %v595, %v594
  %v628 = vpack.c.b16 %v597, %v596
  %v629 = vpack.c.b16 %v599, %v598
  %v630 = vpack.c.b16 %v601, %v600
  %v631 = vpack.c.b16 %v603, %v602
  %v632 = vpack.c.b16 %v605, %v604
  %v633 = vpack.c.b16 %v607, %v606
  %v634 = vpack.c.b16 %v609, %v608
  %v635 = vpack.c.b16 %v611, %v610
  %660 = vmatpush.bf16.msra.mxu0 %v619
  %661 = vmatpush.bf16.msra.mxu0 %v618
  %662 = vmatpush.bf16.msra.mxu0 %v617
  %663 = vmatpush.bf16.msra.mxu0 %v616
  %664 = vmatpush.bf16.msra.mxu0 %v615
  %665 = vmatpush.bf16.msra.mxu0 %v614
  %666 = vmatpush.bf16.msra.mxu0 %v613
  %667 = vmatpush.bf16.msra.mxu0 %v612
  %668 = vmatmul.bf16.gmra.mxu0 %v462
  %v669 = vpop.f32.mrf.mxu0
  %v670 = vadd.f32 0.0, %v669
  %v671 = vpop.f32.mrf.mxu0
  %v672 = vadd.f32 0.0, %v671
  %673 = vmatmul.bf16.gmra.mxu0 %v465
  %v674 = vpop.f32.mrf.mxu0
  %v675 = vadd.f32 0.0, %v674
  %v676 = vpop.f32.mrf.mxu0
  %v677 = vadd.f32 0.0, %v676
  %678 = vdwg.mxu0
  %679 = vmatpush.bf16.msra.mxu0 %v627
  %680 = vmatpush.bf16.msra.mxu0 %v626
  %681 = vmatpush.bf16.msra.mxu0 %v625
  %682 = vmatpush.bf16.msra.mxu0 %v624
  %683 = vmatpush.bf16.msra.mxu0 %v623
  %684 = vmatpush.bf16.msra.mxu0 %v622
  %685 = vmatpush.bf16.msra.mxu0 %v621
  %686 = vmatpush.bf16.msra.mxu0 %v620
  %687 = vmatmul.bf16.gmra.mxu0 %v463
  %v688 = vpop.f32.mrf.mxu0
  %v689 = vadd.f32 %v670, %v688
  %v690 = vpop.f32.mrf.mxu0
  %v691 = vadd.f32 %v672, %v690
  %692 = vmatmul.bf16.gmra.mxu0 %v466
  %v693 = vpop.f32.mrf.mxu0
  %v694 = vadd.f32 %v675, %v693
  %v695 = vpop.f32.mrf.mxu0
  %v696 = vadd.f32 %v677, %v695
  %697 = vdwg.mxu0
  %698 = vmatpush.bf16.msra.mxu0 %v635
  %699 = vmatpush.bf16.msra.mxu0 %v634
  %700 = vmatpush.bf16.msra.mxu0 %v633
  %701 = vmatpush.bf16.msra.mxu0 %v632
  %702 = vmatpush.bf16.msra.mxu0 %v631
  %703 = vmatpush.bf16.msra.mxu0 %v630
  %704 = vmatpush.bf16.msra.mxu0 %v629
  %705 = vmatpush.bf16.msra.mxu0 %v628
  %706 = vmatmul.bf16.gmra.mxu0 %v464
  %v707 = vpop.f32.mrf.mxu0
  %v708 = vadd.f32 %v689, %v707
  %v709 = vpop.f32.mrf.mxu0
  %v710 = vadd.f32 %v691, %v709
  %711 = vmatmul.bf16.gmra.mxu0 %v467
  %v712 = vpop.f32.mrf.mxu0
  %v713 = vadd.f32 %v694, %v712
  %v714 = vpop.f32.mrf.mxu0
  %v715 = vadd.f32 %v696, %v714
  %716 = vdwg.mxu0
  %v717 = vadd.f32 %v708, %v710
  %v718 = vadd.f32 %v717, %v713
  %v719 = vadd.f32 %v718, %v715
  %v720 = vrot.slane %v719, 4
  %v721 = vadd.f32 %v719, %v720
  %v722 = vrot.slane %v721, 2
  %v723 = vadd.f32 %v721, %v722
  %v724 = vrot.slane %v723, 1
  %v725 = vadd.f32 %v723, %v724
  %726 = vrot.lane.b32.xlu0 %v725, 8
  %v727 = vpop.permute.xlu0 %726
  %v728 = vadd.f32 %v725, %v727
  %729 = vrot.lane.b32.xlu0 %v728, 16
  %v730 = vpop.permute.xlu0 %729
  %v731 = vadd.f32 %v728, %v730
  %732 = vrot.lane.b32.xlu0 %v731, 32
  %v733 = vpop.permute.xlu0 %732
  %v734 = vadd.f32 %v731, %v733
  %735 = vrot.lane.b32.xlu0 %v734, 64
  %v736 = vpop.permute.xlu0 %735
  %v737 = vadd.f32 %v734, %v736
  %v738 = vmul.f32 %v737, 0.001953125
  %v739 = vperm.slane %v738, 0
  %v740 = vsub.f32 %v708, %v739
  %v741 = vsub.f32 %v710, %v739
  %v742 = vsub.f32 %v713, %v739
  %v743 = vsub.f32 %v715, %v739
  %v744 = vmul.f32 %v740, %v740
  %v745 = vmul.f32 %v741, %v741
  %v746 = vmul.f32 %v742, %v742
  %v747 = vmul.f32 %v743, %v743
  %v748 = vadd.f32 %v744, %v745
  %v749 = vadd.f32 %v748, %v746
  %v750 = vadd.f32 %v749, %v747
  %v751 = vrot.slane %v750, 4
  %v752 = vadd.f32 %v750, %v751
  %v753 = vrot.slane %v752, 2
  %v754 = vadd.f32 %v752, %v753
  %v755 = vrot.slane %v754, 1
  %v756 = vadd.f32 %v754, %v755
  %757 = vrot.lane.b32.xlu0 %v756, 8
  %v758 = vpop.permute.xlu0 %757
  %v759 = vadd.f32 %v756, %v758
  %760 = vrot.lane.b32.xlu0 %v759, 16
  %v761 = vpop.permute.xlu0 %760
  %v762 = vadd.f32 %v759, %v761
  %763 = vrot.lane.b32.xlu0 %v762, 32
  %v764 = vpop.permute.xlu0 %763
  %v765 = vadd.f32 %v762, %v764
  %766 = vrot.lane.b32.xlu0 %v765, 64
  %v767 = vpop.permute.xlu0 %766
  %v768 = vadd.f32 %v765, %v767
  %v769 = vmul.f32 %v768, 0.001953125
  %v770 = vld [vmem:[%s6] sm:$0x1]
  %v771 = vadd.f32 %v769, 1e-05
  %v772 = vrsqrt.pop %v771
  %v773 = vmul.f32 %v772, %v771
  %v774 = vmul.f32 %v773, %v772
  %v775 = vmul.f32 0.5, %v774
  %v776 = vsub.f32 1.5, %v775
  %v777 = vmul.f32 %v772, %v776
  %vm778 = vweird.f32 %v771
  %vm779 = vweird.f32 %v772
  %vm780 = vmor %vm778, %vm779
  %v781 = vsel %vm780, %v772, %v777
  %v782 = vmul.f32 %v770, %v781
  %v784 = vperm.slane %v782, 0
  %v786 = vmul.f32 %v740, %v784
  %v787 = vmul.f32 %v741, %v784
  %v788 = vmul.f32 %v742, %v784
  %v789 = vmul.f32 %v743, %v784
  %v790 = vld [vmem:[%s7] sm:$0x1]
  %v792 = vperm.slane %v790, 0
  %v794 = vadd.f32 %v786, %v792
  %v795 = vadd.f32 %v787, %v792
  %v796 = vadd.f32 %v788, %v792
  %v797 = vadd.f32 %v789, %v792
  %v798 = vld [vmem:[%s3] sm:$0xf]
  %v799 = vld [vmem:[%s3 + $0x4] sm:$0xf]
  %v800 = vld [vmem:[%s3 + $0x8] sm:$0xf]
  %v801 = vld [vmem:[%s3 + $0xc] sm:$0xf]
  %v802 = vld [vmem:[%s3 + $0x10] sm:$0xf]
  %v803 = vld [vmem:[%s3 + $0x14] sm:$0xf]
  %v804 = vld [vmem:[%s3 + $0x18] sm:$0xf]
  %v805 = vld [vmem:[%s3 + $0x1c] sm:$0xf]
  %v806 = vld [vmem:[%s3 + $0x20] sm:$0xf]
  %v807 = vld [vmem:[%s3 + $0x24] sm:$0xf]
  %v808 = vld [vmem:[%s3 + $0x28] sm:$0xf]
  %v809 = vld [vmem:[%s3 + $0x2c] sm:$0xf]
  %v810 = vld [vmem:[%s3 + $0x30] sm:$0xf]
  %v811 = vld [vmem:[%s3 + $0x34] sm:$0xf]
  %v812 = vld [vmem:[%s3 + $0x38] sm:$0xf]
  %v813 = vld [vmem:[%s3 + $0x3c] sm:$0xf]
  %v830 = vunpack.c.l.b16 %v798
  %v831 = vunpack.c.l.b16 %v799
  %v832 = vunpack.c.l.b16 %v800
  %v833 = vunpack.c.l.b16 %v801
  %v834 = vunpack.c.l.b16 %v802
  %v835 = vunpack.c.l.b16 %v803
  %v836 = vunpack.c.l.b16 %v804
  %v837 = vunpack.c.l.b16 %v805
  %v838 = vunpack.c.l.b16 %v806
  %v839 = vunpack.c.l.b16 %v807
  %v840 = vunpack.c.l.b16 %v808
  %v841 = vunpack.c.l.b16 %v809
  %v842 = vunpack.c.l.b16 %v810
  %v843 = vunpack.c.l.b16 %v811
  %v844 = vunpack.c.l.b16 %v812
  %v845 = vunpack.c.l.b16 %v813
  %v846 = vpack.c.b16 %v831, %v830
  %v847 = vpack.c.b16 %v833, %v832
  %v848 = vpack.c.b16 %v835, %v834
  %v849 = vpack.c.b16 %v837, %v836
  %v850 = vpack.c.b16 %v839, %v838
  %v851 = vpack.c.b16 %v841, %v840
  %v852 = vpack.c.b16 %v843, %v842
  %v853 = vpack.c.b16 %v845, %v844
  %862 = vmatpush.bf16.msra.mxu0 %v853
  %863 = vmatpush.bf16.msra.mxu0 %v852
  %864 = vmatpush.bf16.msra.mxu0 %v851
  %865 = vmatpush.bf16.msra.mxu0 %v850
  %866 = vmatpush.bf16.msra.mxu0 %v849
  %867 = vmatpush.bf16.msra.mxu0 %v848
  %868 = vmatpush.bf16.msra.mxu0 %v847
  %869 = vmatpush.bf16.msra.mxu0 %v846
  %870 = vmatmul.bf16.gmra.mxu0 %v99
  %v871 = vpop.f32.mrf.mxu0
  %v872 = vadd.f32 0.0, %v871
  %v873 = vpop.f32.mrf.mxu0
  %v874 = vadd.f32 0.0, %v873
  %875 = vmatmul.bf16.gmra.mxu0 %v102
  %v876 = vpop.f32.mrf.mxu0
  %v877 = vadd.f32 0.0, %v876
  %v878 = vpop.f32.mrf.mxu0
  %v879 = vadd.f32 0.0, %v878
  %880 = vdwg.mxu0
  %v881 = vadd.f32 %v872, %v874
  %v882 = vadd.f32 %v881, %v877
  %v883 = vadd.f32 %v882, %v879
  %v884 = vrot.slane %v883, 4
  %v885 = vadd.f32 %v883, %v884
  %v886 = vrot.slane %v885, 2
  %v887 = vadd.f32 %v885, %v886
  %v888 = vrot.slane %v887, 1
  %v889 = vadd.f32 %v887, %v888
  %890 = vrot.lane.b32.xlu0 %v889, 8
  %v891 = vpop.permute.xlu0 %890
  %v892 = vadd.f32 %v889, %v891
  %893 = vrot.lane.b32.xlu0 %v892, 16
  %v894 = vpop.permute.xlu0 %893
  %v895 = vadd.f32 %v892, %v894
  %896 = vrot.lane.b32.xlu0 %v895, 32
  %v897 = vpop.permute.xlu0 %896
  %v898 = vadd.f32 %v895, %v897
  %899 = vrot.lane.b32.xlu0 %v898, 64
  %v900 = vpop.permute.xlu0 %899
  %v901 = vadd.f32 %v898, %v900
  %v902 = vmul.f32 %v901, 0.001953125
  %v903 = vperm.slane %v902, 0
  %v904 = vsub.f32 %v872, %v903
  %v905 = vsub.f32 %v874, %v903
  %v906 = vsub.f32 %v877, %v903
  %v907 = vsub.f32 %v879, %v903
  %v908 = vmul.f32 %v904, %v904
  %v909 = vmul.f32 %v905, %v905
  %v910 = vmul.f32 %v906, %v906
  %v911 = vmul.f32 %v907, %v907
  %v912 = vadd.f32 %v908, %v909
  %v913 = vadd.f32 %v912, %v910
  %v914 = vadd.f32 %v913, %v911
  %v915 = vrot.slane %v914, 4
  %v916 = vadd.f32 %v914, %v915
  %v917 = vrot.slane %v916, 2
  %v918 = vadd.f32 %v916, %v917
  %v919 = vrot.slane %v918, 1
  %v920 = vadd.f32 %v918, %v919
  %921 = vrot.lane.b32.xlu0 %v920, 8
  %v922 = vpop.permute.xlu0 %921
  %v923 = vadd.f32 %v920, %v922
  %924 = vrot.lane.b32.xlu0 %v923, 16
  %v925 = vpop.permute.xlu0 %924
  %v926 = vadd.f32 %v923, %v925
  %927 = vrot.lane.b32.xlu0 %v926, 32
  %v928 = vpop.permute.xlu0 %927
  %v929 = vadd.f32 %v926, %v928
  %930 = vrot.lane.b32.xlu0 %v929, 64
  %v931 = vpop.permute.xlu0 %930
  %v932 = vadd.f32 %v929, %v931
  %v933 = vmul.f32 %v932, 0.001953125
  %v934 = vld [vmem:[%s8] sm:$0x1]
  %v935 = vadd.f32 %v933, 1e-05
  %v936 = vrsqrt.pop %v935
  %v937 = vmul.f32 %v936, %v935
  %v938 = vmul.f32 %v937, %v936
  %v939 = vmul.f32 0.5, %v938
  %v940 = vsub.f32 1.5, %v939
  %v941 = vmul.f32 %v936, %v940
  %vm942 = vweird.f32 %v935
  %vm943 = vweird.f32 %v936
  %vm944 = vmor %vm942, %vm943
  %v945 = vsel %vm944, %v936, %v941
  %v946 = vmul.f32 %v934, %v945
  %v948 = vperm.slane %v946, 0
  %v950 = vmul.f32 %v904, %v948
  %v951 = vmul.f32 %v905, %v948
  %v952 = vmul.f32 %v906, %v948
  %v953 = vmul.f32 %v907, %v948
  %v954 = vld [vmem:[%s9] sm:$0x1]
  %v956 = vperm.slane %v954, 0
  %v958 = vadd.f32 %v950, %v956
  %v959 = vadd.f32 %v951, %v956
  %v960 = vadd.f32 %v952, %v956
  %v961 = vadd.f32 %v953, %v956
  %v962 = vadd.f32 %v794, %v958
  %v963 = vadd.f32 %v795, %v959
  %v964 = vadd.f32 %v796, %v960
  %v965 = vadd.f32 %v797, %v961
  %v966 = vmax.f32 %v962, 0.0
  %v967 = vmax.f32 %v963, 0.0
  %v968 = vmax.f32 %v964, 0.0
  %v969 = vmax.f32 %v965, 0.0
  %970 = vst [vmem:[%s10] sm:$0xff] %v966
  %971 = vst [vmem:[%s10 + $0x8] sm:$0xff] %v967
  %972 = vst [vmem:[%s10 + $0x10] sm:$0xff] %v968
  %973 = vst [vmem:[%s10 + $0x18] sm:$0xff] %v969
  // Predicated region
  $region42: #{res_block_forward.1} parent=0 // pred_check
    _
  $region43: #{res_block_forward.1} parent=0 // pred_check_branch
    %975 = sbr.rel (0) target = $region45
  $region44: #{res_block_forward.1} parent=0 // pred_region
    _
  $region45: #{res_block_forward.1} parent=0 // pred_fallthru
    _
  // Predicated region
  $region46: #{res_block_forward.1} parent=0 // pred_check
    _
  $region47: #{res_block_forward.1} parent=0 // pred_check_branch
    %977 = sbr.rel (0) target = $region49
  $region48: #{res_block_forward.1} parent=0 // pred_region
    _
  $region49: #{res_block_forward.1} parent=0 // pred_fallthru
    _

</llo_original>
